<compile_context>
chip_gen: v7x
topology: tpu7x:2x2x1
jax: 0.10.0
libtpu: 0.0.40
codegen_flags: <defaults>
</compile_context>

<pallas_src>
import functools

import jax
import jax.numpy as jnp
from jax.experimental import pallas as pl
from jax.experimental.pallas import tpu as pltpu


def _lm_loss_kernel(labels_ref, logits_ref, out_ref,
                    m_sc, l_sc, tgt_sc, slog_sc=None,
                    *, pad_idx, label_smoothing, tile_n, tile_v,
                    n_tokens, vocab, ragged_vocab):
    it = pl.program_id(0)            # token-block index ("parallel")
    jv = pl.program_id(1)            # vocab-chunk index ("arbitrary", innermost)

    @pl.when(jv == 0)
    def _():
        m_sc[...] = jnp.full_like(m_sc, -jnp.inf)
        l_sc[...] = jnp.zeros_like(l_sc)
        tgt_sc[...] = jnp.zeros_like(tgt_sc)
        if label_smoothing > 0.0:
            slog_sc[...] = jnp.zeros_like(slog_sc)

    logits = logits_ref[...].astype(jnp.float32)      # (tile_n, tile_v)
    labels = labels_ref[...]                          # (tile_n, 1) int32

    # Lane-local column index, reused for ragged-vocab masking and the gather.
    lane = jax.lax.broadcasted_iota(jnp.int32, (tile_n, tile_v), 1)

    if ragged_vocab:
        # Valid columns remaining in this chunk (>= tile_v for full chunks).
        v_rem = vocab - jv * tile_v
        lane_ok = lane < v_rem
        # -inf on OOB lanes: neutral for max, exp(-inf - m) == 0 for the sum,
        # and jnp.where so garbage/NaN in the padded block cannot leak.
        logits_m = jnp.where(lane_ok, logits, -jnp.inf)
    else:
        logits_m = logits

    # --- online log-sum-exp over vocab chunks -------------------------------
    m_prev = m_sc[...]
    m_new = jnp.maximum(m_prev, jnp.max(logits_m, axis=-1, keepdims=True))
    alpha = jnp.exp(m_prev - m_new)                   # 0 on the first chunk
    l_sc[...] = alpha * l_sc[...] + jnp.sum(jnp.exp(logits_m - m_new),
                                            axis=-1, keepdims=True)
    m_sc[...] = m_new

    # --- target-logit gather: lane-local iota vs per-row shifted label ------
    # (no full-tile `+ jv*tile_v`; the shift is folded into the (tile_n,1) labels)
    shifted = labels - jv * tile_v                    # (tile_n, 1)
    tgt_sc[...] += jnp.sum(jnp.where(lane == shifted, logits_m, 0.0),
                           axis=-1, keepdims=True)

    if label_smoothing > 0.0:
        if ragged_vocab:
            slog_sc[...] += jnp.sum(jnp.where(lane_ok, logits, 0.0),
                                    axis=-1, keepdims=True)
        else:
            slog_sc[...] += jnp.sum(logits, axis=-1, keepdims=True)

    # --- epilogue: per-token loss, mask pads & ragged token rows --------------
    @pl.when(jv == pl.num_programs(1) - 1)
    def _():
        lse = m_sc[...] + jnp.log(l_sc[...])          # (tile_n, 1)
        nll = lse - tgt_sc[...]                       # -log p_target
        if label_smoothing > 0.0:
            # PyTorch: (1-eps)*nll + eps * mean_c(-log p_c)
            smooth = lse - slog_sc[...] * (1.0 / vocab)
            per_tok = (1.0 - label_smoothing) * nll + label_smoothing * smooth
        else:
            per_tok = nll

        row = it * tile_n + jax.lax.broadcasted_iota(jnp.int32, (tile_n, 1), 0)
        valid = jnp.logical_and(labels != pad_idx, row < n_tokens)
        # jnp.where (not multiply) so NaN/Inf garbage in ragged rows can't leak.
        out_ref[...] = jnp.where(valid, per_tok, 0.0)


def _round_down(x, m):
    return (x // m) * m


def _choose_tile_v(V, max_tile_v):
    """Full vocab if it fits in one chunk; otherwise a multiple-of-128 chunk.
    The ragged last chunk (when tile_v does not divide V) is masked in-kernel."""
    max_tile_v = max(128, _round_down(int(max_tile_v), 128))
    if V <= max_tile_v:
        return V                      # full-dim block is always legal
    return max_tile_v


def _choose_tile_n(N, tile_v, in_bytes, tile_budget, pack, max_tile_n=512):
    """Token-block rows sized against the real working set (double-buffered
    input block + ~4 live full-width f32 temporaries), rounded to the input
    dtype's sublane pack, capped so a 2-TC chip keeps >= 2 token blocks."""
    if N <= pack:
        return max(N, 1)                           # full-dim block for tiny N
    per_row = tile_v * (2 * in_bytes + 4 * 4)      # dbl-buffered input + f32 temps
    tn = _round_down(max(tile_budget // per_row, pack), pack)
    tn = min(tn, max_tile_n, _round_down(N, pack))
    half = _round_down((N + 1) // 2, pack)         # megacore: keep g_t >= 2
    if half >= pack:
        tn = min(tn, half)
    return max(tn, pack)


def lm_loss(logits, labels, *, pad_idx, label_smoothing=0.0,
            max_tile_n=512, max_tile_v=4096):
    """logits: (B, S, V) float (f32 or bf16); labels: (B, S) int. Scalar f32 loss."""
    V = logits.shape[-1]
    logits2d = logits.reshape(-1, V)
    labels2d = labels.reshape(-1, 1).astype(jnp.int32)
    N = logits2d.shape[0]

    # Size tiles / scoped-VMEM limit against the actual chip (64 MiB fallback
    # so v7x is never over-committed).
    try:
        vmem_phys = int(getattr(pltpu.get_tpu_info(), "vmem_capacity_bytes",
                                64 * 1024 * 1024))
    except Exception:
        vmem_phys = 64 * 1024 * 1024
    vmem_limit = int(vmem_phys * 0.65)

    in_bytes = jnp.dtype(logits.dtype).itemsize
    pack = max(8, 32 // max(in_bytes, 1))          # f32->8, bf16->16, int8->32

    tile_v = _choose_tile_v(V, max_tile_v)
    tile_n = _choose_tile_n(N, tile_v, in_bytes,
                            tile_budget=int(vmem_limit * 0.55),
                            pack=pack, max_tile_n=max_tile_n)
    g_t = pl.cdiv(N, tile_n)
    g_v = pl.cdiv(V, tile_v)
    ragged_vocab = (V % tile_v) != 0

    kernel = functools.partial(
        _lm_loss_kernel,
        pad_idx=int(pad_idx),
        label_smoothing=float(label_smoothing),
        tile_n=tile_n, tile_v=tile_v, n_tokens=N, vocab=V,
        ragged_vocab=ragged_vocab)

    scratch = [pltpu.VMEM((tile_n, 1), jnp.float32),   # running max
               pltpu.VMEM((tile_n, 1), jnp.float32),   # running sum of exp
               pltpu.VMEM((tile_n, 1), jnp.float32)]   # target logit
    if label_smoothing > 0.0:
        scratch.append(pltpu.VMEM((tile_n, 1), jnp.float32))  # sum of logits

    per_tok = pl.pallas_call(
        kernel,
        out_shape=jax.ShapeDtypeStruct((N, 1), jnp.float32),
        grid_spec=pltpu.PrefetchScalarGridSpec(
            num_scalar_prefetch=0,
            grid=(g_t, g_v),
            in_specs=[
                pl.BlockSpec((tile_n, 1), lambda i, j: (i, 0)),       # labels
                pl.BlockSpec((tile_n, tile_v), lambda i, j: (i, j)),  # logits
            ],
            out_specs=pl.BlockSpec((tile_n, 1), lambda i, j: (i, 0)),
            scratch_shapes=scratch),
        compiler_params=pltpu.CompilerParams(
            dimension_semantics=("parallel", "arbitrary"),
            vmem_limit_bytes=vmem_limit),
    )(labels2d, logits2d)

    # Mean over non-pad tokens.  0/0 -> NaN if every token is pad, matching
    # PyTorch CrossEntropyLoss(reduction='mean', ignore_index=pad_idx).
    count = jnp.sum((labels2d != pad_idx).astype(jnp.float32))
    return jnp.sum(per_tok) / count


def _reference_loss(logits, labels, pad_idx, label_smoothing=0.0):
    """Pure-JAX reference matching torch.nn.CrossEntropyLoss semantics."""
    V = logits.shape[-1]
    lg = logits.reshape(-1, V).astype(jnp.float32)
    lb = labels.reshape(-1)
    lse = jax.nn.logsumexp(lg, axis=-1)
    tgt = jnp.take_along_axis(lg, lb[:, None], axis=-1)[:, 0]
    nll = lse - tgt
    smooth = lse - jnp.mean(lg, axis=-1)
    per_tok = (1.0 - label_smoothing) * nll + label_smoothing * smooth
    valid = (lb != pad_idx).astype(jnp.float32)
    return jnp.sum(per_tok * valid) / jnp.sum(valid)


if __name__ == "__main__":
    B, S, V = 2, 8, 32
    PAD_IDX = 0

    key = jax.random.PRNGKey(0)
    k1, k2, k3 = jax.random.split(key, 3)
    logits = jax.random.normal(k1, (B, S, V), dtype=jnp.float32)
    labels = jax.random.randint(k2, (B, S), 0, V, dtype=jnp.int32)
    # Sprinkle in a few pad tokens so the ignore_index path is exercised.
    labels = labels.at[0, 0].set(PAD_IDX).at[1, 3].set(PAD_IDX)

    # 1) plain cross-entropy
    loss = jax.block_until_ready(lm_loss(logits, labels, pad_idx=PAD_IDX))
    ref = _reference_loss(logits, labels, PAD_IDX, 0.0)
    assert jnp.allclose(loss, ref, rtol=1e-5, atol=1e-5), (loss, ref)

    # 2) label smoothing path
    loss_ls = jax.block_until_ready(
        lm_loss(logits, labels, pad_idx=PAD_IDX, label_smoothing=0.1))
    ref_ls = _reference_loss(logits, labels, PAD_IDX, 0.1)
    assert jnp.allclose(loss_ls, ref_ls, rtol=1e-5, atol=1e-5), (loss_ls, ref_ls)

    # 3) ragged token count (N not a multiple of the token tile) -> in-kernel mask
    logits_r, labels_r = logits[:, :7, :], labels[:, :7]
    loss_r = jax.block_until_ready(lm_loss(logits_r, labels_r, pad_idx=PAD_IDX))
    ref_r = _reference_loss(logits_r, labels_r, PAD_IDX, 0.0)
    assert jnp.allclose(loss_r, ref_r, rtol=1e-5, atol=1e-5), (loss_r, ref_r)

    # 4) bf16 ingestion (halves HBM traffic on mem-bound v5e/v6e); math stays f32
    loss_bf = jax.block_until_ready(
        lm_loss(logits.astype(jnp.bfloat16), labels, pad_idx=PAD_IDX))
    ref_bf = _reference_loss(logits.astype(jnp.bfloat16), labels, PAD_IDX, 0.0)
    assert jnp.allclose(loss_bf, ref_bf, rtol=1e-4, atol=1e-4), (loss_bf, ref_bf)

    # 5) vocab chunking with a ragged last chunk (V=160, tile_v=128) + smoothing,
    #    exercising the new cdiv vocab grid and in-kernel lane masking.
    V2 = 160
    logits_v = jax.random.normal(k3, (B, S, V2), dtype=jnp.float32)
    labels_v = jax.random.randint(k2, (B, S), 0, V2, dtype=jnp.int32)
    labels_v = labels_v.at[0, 1].set(PAD_IDX)
    loss_v = jax.block_until_ready(
        lm_loss(logits_v, labels_v, pad_idx=PAD_IDX, label_smoothing=0.1,
                max_tile_v=128))
    ref_v = _reference_loss(logits_v, labels_v, PAD_IDX, 0.1)
    assert jnp.allclose(loss_v, ref_v, rtol=1e-5, atol=1e-5), (loss_v, ref_v)

    print("KERNEL_OK")
</pallas_src>

<mosaic_0001>
module attributes {stable_mosaic.version = 11 : i64} {
  func.func @_lm_loss_kernel(%arg0: i32, %arg1: i32, %arg2: memref<8x1xi32, #tpu.memory_space<vmem>>, %arg3: memref<8x32xf32, #tpu.memory_space<vmem>>, %arg4: memref<8x1xf32, #tpu.memory_space<vmem>>, %arg5: memref<8x1xf32, #tpu.memory_space<vmem>>, %arg6: memref<8x1xf32, #tpu.memory_space<vmem>>, %arg7: memref<8x1xf32, #tpu.memory_space<vmem>>) attributes {dimension_semantics = [#tpu.dimension_semantics<parallel>, #tpu.dimension_semantics<arbitrary>], iteration_bounds = array<i64: 2, 1>, scalar_prefetch = 0 : i64, scratch_operands = 3 : i64, tpu.core_type = #tpu.core_type<tc>, window_params = [{transform_indices = @transform_0, window_bounds = array<i64: 8, 1>}, {transform_indices = @transform_1, window_bounds = array<i64: 8, 32>}, {transform_indices = @transform_2, window_bounds = array<i64: 8, 1>}]} {
    %c0_i32 = arith.constant 0 : i32
    %0 = arith.cmpi eq, %arg1, %c0_i32 : i32
    %1 = arith.extui %0 : i1 to i32
    %c0_i32_0 = arith.constant 0 : i32
    %2 = arith.cmpi ne, %1, %c0_i32_0 : i32
    scf.if %2 {
      %cst_21 = arith.constant 0xFF800000 : f32
      %37 = vector.broadcast %cst_21 : f32 to vector<8x1xf32>
      %c0_22 = arith.constant 0 : index
      %c0_23 = arith.constant 0 : index
      %38 = vector.load %arg5[%c0_22, %c0_23] : memref<8x1xf32, #tpu.memory_space<vmem>>, vector<8x1xf32>
      tpu.vector_store %arg5[%c0_22, %c0_23], %37 {strides = array<i32>} : memref<8x1xf32, #tpu.memory_space<vmem>>, vector<8x1xf32>,
      %cst_24 = arith.constant 0.000000e+00 : f32
      %39 = vector.broadcast %cst_24 : f32 to vector<8x1xf32>
      %c0_25 = arith.constant 0 : index
      %c0_26 = arith.constant 0 : index
      %40 = vector.load %arg6[%c0_25, %c0_26] : memref<8x1xf32, #tpu.memory_space<vmem>>, vector<8x1xf32>
      tpu.vector_store %arg6[%c0_25, %c0_26], %39 {strides = array<i32>} : memref<8x1xf32, #tpu.memory_space<vmem>>, vector<8x1xf32>,
      %cst_27 = arith.constant 0.000000e+00 : f32
      %41 = vector.broadcast %cst_27 : f32 to vector<8x1xf32>
      %c0_28 = arith.constant 0 : index
      %c0_29 = arith.constant 0 : index
      %42 = vector.load %arg7[%c0_28, %c0_29] : memref<8x1xf32, #tpu.memory_space<vmem>>, vector<8x1xf32>
      tpu.vector_store %arg7[%c0_28, %c0_29], %41 {strides = array<i32>} : memref<8x1xf32, #tpu.memory_space<vmem>>, vector<8x1xf32>,
    } else {
    }
    %c0 = arith.constant 0 : index
    %c0_1 = arith.constant 0 : index
    %3 = vector.load %arg3[%c0, %c0_1] : memref<8x32xf32, #tpu.memory_space<vmem>>, vector<8x32xf32>
    %c0_2 = arith.constant 0 : index
    %c0_3 = arith.constant 0 : index
    %4 = vector.load %arg2[%c0_2, %c0_3] : memref<8x1xi32, #tpu.memory_space<vmem>>, vector<8x1xi32>
    %5 = tpu.iota {dimensions = array<i32: 1>} : vector<8x32xi32>
    %c0_4 = arith.constant 0 : index
    %c0_5 = arith.constant 0 : index
    %6 = vector.load %arg5[%c0_4, %c0_5] : memref<8x1xf32, #tpu.memory_space<vmem>>, vector<8x1xf32>
    %cst = arith.constant dense<0xFF800000> : vector<8xf32>
    %7 = vector.multi_reduction <maximumf>, %3, %cst [1] : vector<8x32xf32> to vector<8xf32>
    %8 = vector.shape_cast %7 : vector<8xf32> to vector<8x1xf32>
    %9 = arith.maximumf %6, %8 : vector<8x1xf32>
    %10 = arith.subf %6, %9 : vector<8x1xf32>
    %11 = math.exp %10 : vector<8x1xf32>
    %c0_6 = arith.constant 0 : index
    %c0_7 = arith.constant 0 : index
    %12 = vector.load %arg6[%c0_6, %c0_7] : memref<8x1xf32, #tpu.memory_space<vmem>>, vector<8x1xf32>
    %13 = arith.mulf %11, %12 : vector<8x1xf32>
    %14 = vector.broadcast %9 : vector<8x1xf32> to vector<8x32xf32>
    %15 = arith.subf %3, %14 : vector<8x32xf32>
    %16 = math.exp %15 : vector<8x32xf32>
    %cst_8 = arith.constant dense<0.000000e+00> : vector<8xf32>
    %17 = vector.multi_reduction <add>, %16, %cst_8 [1] : vector<8x32xf32> to vector<8xf32>
    %18 = vector.shape_cast %17 : vector<8xf32> to vector<8x1xf32>
    %19 = arith.addf %13, %18 : vector<8x1xf32>
    %c0_9 = arith.constant 0 : index
    %c0_10 = arith.constant 0 : index
    %20 = vector.load %arg6[%c0_9, %c0_10] : memref<8x1xf32, #tpu.memory_space<vmem>>, vector<8x1xf32>
    tpu.vector_store %arg6[%c0_9, %c0_10], %19 {strides = array<i32>} : memref<8x1xf32, #tpu.memory_space<vmem>>, vector<8x1xf32>,
    %c0_11 = arith.constant 0 : index
    %c0_12 = arith.constant 0 : index
    %21 = vector.load %arg5[%c0_11, %c0_12] : memref<8x1xf32, #tpu.memory_space<vmem>>, vector<8x1xf32>
    tpu.vector_store %arg5[%c0_11, %c0_12], %9 {strides = array<i32>} : memref<8x1xf32, #tpu.memory_space<vmem>>, vector<8x1xf32>,
    %c32_i32 = arith.constant 32 : i32
    %22 = arith.muli %arg1, %c32_i32 : i32
    %23 = vector.broadcast %22 : i32 to vector<8x1xi32>
    %24 = arith.subi %4, %23 : vector<8x1xi32>
    %c0_13 = arith.constant 0 : index
    %c0_14 = arith.constant 0 : index
    %25 = vector.load %arg7[%c0_13, %c0_14] : memref<8x1xf32, #tpu.memory_space<vmem>>, vector<8x1xf32>
    %26 = vector.broadcast %24 : vector<8x1xi32> to vector<8x32xi32>
    %27 = arith.cmpi eq, %5, %26 : vector<8x32xi32>
    %cst_15 = arith.constant 0.000000e+00 : f32
    %28 = vector.broadcast %cst_15 : f32 to vector<8x32xf32>
    %29 = arith.select %27, %3, %28 : vector<8x32xi1>, vector<8x32xf32>
    %cst_16 = arith.constant dense<0.000000e+00> : vector<8xf32>
    %30 = vector.multi_reduction <add>, %29, %cst_16 [1] : vector<8x32xf32> to vector<8xf32>
    %31 = vector.shape_cast %30 : vector<8xf32> to vector<8x1xf32>
    %32 = arith.addf %25, %31 : vector<8x1xf32>
    %c0_17 = arith.constant 0 : index
    %c0_18 = arith.constant 0 : index
    %33 = vector.load %arg7[%c0_17, %c0_18] : memref<8x1xf32, #tpu.memory_space<vmem>>, vector<8x1xf32>
    tpu.vector_store %arg7[%c0_17, %c0_18], %32 {strides = array<i32>} : memref<8x1xf32, #tpu.memory_space<vmem>>, vector<8x1xf32>,
    %c0_i32_19 = arith.constant 0 : i32
    %34 = arith.cmpi eq, %arg1, %c0_i32_19 : i32
    %35 = arith.extui %34 : i1 to i32
    %c0_i32_20 = arith.constant 0 : i32
    %36 = arith.cmpi ne, %35, %c0_i32_20 : i32
    scf.if %36 {
      %c0_21 = arith.constant 0 : index
      %c0_22 = arith.constant 0 : index
      %37 = vector.load %arg5[%c0_21, %c0_22] : memref<8x1xf32, #tpu.memory_space<vmem>>, vector<8x1xf32>
      %c0_23 = arith.constant 0 : index
      %c0_24 = arith.constant 0 : index
      %38 = vector.load %arg6[%c0_23, %c0_24] : memref<8x1xf32, #tpu.memory_space<vmem>>, vector<8x1xf32>
      %39 = math.log %38 : vector<8x1xf32>
      %40 = arith.addf %37, %39 : vector<8x1xf32>
      %c0_25 = arith.constant 0 : index
      %c0_26 = arith.constant 0 : index
      %41 = vector.load %arg7[%c0_25, %c0_26] : memref<8x1xf32, #tpu.memory_space<vmem>>, vector<8x1xf32>
      %42 = arith.subf %40, %41 : vector<8x1xf32>
      %c8_i32 = arith.constant 8 : i32
      %43 = arith.muli %arg0, %c8_i32 : i32
      %44 = tpu.iota {dimensions = array<i32: 0>} : vector<8x1xi32>
      %45 = vector.broadcast %43 : i32 to vector<8x1xi32>
      %46 = arith.addi %45, %44 : vector<8x1xi32>
      %c0_i32_27 = arith.constant 0 : i32
      %47 = vector.broadcast %c0_i32_27 : i32 to vector<8x1xi32>
      %48 = arith.cmpi ne, %4, %47 : vector<8x1xi32>
      %c16_i32 = arith.constant 16 : i32
      %49 = vector.broadcast %c16_i32 : i32 to vector<8x1xi32>
      %50 = arith.cmpi slt, %46, %49 : vector<8x1xi32>
      %51 = arith.andi %48, %50 : vector<8x1xi1>
      %cst_28 = arith.constant 0.000000e+00 : f32
      %52 = vector.broadcast %cst_28 : f32 to vector<8x1xf32>
      %53 = arith.select %51, %42, %52 : vector<8x1xi1>, vector<8x1xf32>
      %c0_29 = arith.constant 0 : index
      %c0_30 = arith.constant 0 : index
      %54 = vector.load %arg4[%c0_29, %c0_30] : memref<8x1xf32, #tpu.memory_space<vmem>>, vector<8x1xf32>
      tpu.vector_store %arg4[%c0_29, %c0_30], %53 {strides = array<i32>} : memref<8x1xf32, #tpu.memory_space<vmem>>, vector<8x1xf32>,
    } else {
    }
    return
  }
  func.func @transform_0(%arg0: i32, %arg1: i32) -> (i32, i32) {
    %c0_i32 = arith.constant 0 : i32
    %c0_i32_0 = arith.constant 0 : i32
    return %arg0, %c0_i32 : i32, i32
  }
  func.func @transform_1(%arg0: i32, %arg1: i32) -> (i32, i32) {
    %c0_i32 = arith.constant 0 : i32
    return %arg0, %arg1 : i32, i32
  }
  func.func @transform_2(%arg0: i32, %arg1: i32) -> (i32, i32) {
    %c0_i32 = arith.constant 0 : i32
    %c0_i32_0 = arith.constant 0 : i32
    return %arg0, %c0_i32 : i32, i32
  }
}

</mosaic_0001>

<llo_original>
// kernel: tpu_custom_call.1
$region0: #{tpu_custom_call.1}
  #allocation0 [shape = 'u32[]', space=smem, size = 0x4, offset = 0x4, fixed_abs, tag = 'smem constant byte address 0x4 - core index']
  #allocation1 [shape = 'u32[144,128]{1,0:T(1,128)}', space=vmem, size = 0x12000, scoped, tag = 'internal scratch']
  #allocation2 [shape = 'f32[8,1]{1,0:T(8,128)}', space=vmem, size = 0x1000, scoped, tag = 'scratch operand']
  #allocation3 [shape = 'f32[8,1]{1,0:T(8,128)}', space=vmem, size = 0x1000, scoped, tag = 'scratch operand']
  #allocation4 [shape = 'f32[8,1]{1,0:T(8,128)}', space=vmem, size = 0x1000, scoped, tag = 'scratch operand']
  %s0 = inlined_call_operand.vmem [shape: s32[16,1], index: 0, kind: input, shape index: {}]
  %s1 = inlined_call_operand.vmem [shape: f32[16,32], index: 1, kind: input, shape index: {}]
  %s2 = inlined_call_operand.vmem [shape: f32[16,1], index: 2, kind: output, shape index: {}]
  %s3 = sld [smem:[#allocation0]]
  $region49: #{tpu_custom_call.1} parent=0
    _
  %s5 = ssub.s32 1, %s3
  %s6 = scalar_select 0, %s5, %s3
  loop: start=0, step=1, limit=4
  $region2: #{tpu_custom_call.1} parent=0 // loop_pre_header
    _
  $region3: #{tpu_custom_call.1} parent=0 // loop_header
    %s8 = sphi 0, %s12
    %p9 = scmp.ge.s32.totalorder %s8, 4
    %s15 = sphi 0, %s27
    %s16 = sphi 0, %s23
    %s17 = sphi 0, %s15
    %s18 = sphi 0, %s16
    %s19 = sphi 0, %s17
    %s20 = sphi 0, %s18
    %s30 = sphi 0, %s32
    %s33 = sphi 0, %s30
    %s34 = sphi 0, %s33
    %s50 = sphi 0, %s34
    %s58 = sphi 0, %s60
    %s61 = sphi 0, %s58
    %s62 = sphi 0, %s61
    %s78 = sphi 0, %s62
    %s84 = sphi 0, %s86
    %s87 = sphi 0, %s84
    %s88 = sphi 0, %s87
    %s104 = sphi 0, %s88
  $region4: #{tpu_custom_call.1} parent=0 // loop_header_branch
    %11 = sbr.rel (%p9) target = $region8
  $region5: #{tpu_custom_call.1} parent=0 // loop_body
    %s13 = ssub.s32 %s8, 1
    %s14 = ssub.s32 %s8, 2
    %s21 = sadd.s32 1, %s16
    %p22 = scmp.ge.s32.totalorder %s21, 1
    %s23 = scalar_select %p22, 0, %s21
    %s24 = sadd.s32 1, %s15
    %s25 = scalar_select %p22, %s24, %s15
    %p26 = scmp.ge.s32.totalorder %s25, 2
    %s27 = scalar_select %p26, 0, %s25
    %s28 = ssub.s32 %s15, %s27
    %p29 = scmp.eq.s32.totalorder %s28, 0
    %s31 = sadd.s32 %s30, 1
    %s32 = scalar_select %p29, %s30, %s31
    %p35 = pneg %p29
    %p36 = scmp.eq.s32.totalorder %s8, 1
    %p37 = por %p35, %p36
    %p38 = scmp.ne.s32.totalorder %s30, %s33
    %p39 = scmp.eq.s32.totalorder %s8, 0
    %p40 = por %p38, %p39
    %p41 = scmp.ne.s32.totalorder %s30, %s33
    %p42 = scmp.eq.s32.totalorder %s13, 1
    %p43 = por %p41, %p42
    %p44 = scmp.ne.s32.totalorder %s33, %s34
    %p45 = scmp.eq.s32.totalorder %s13, 0
    %p46 = por %p44, %p45
    %p47 = scmp.ne.s32.totalorder %s33, %s34
    %p48 = scmp.eq.s32.totalorder %s14, 1
    %p49 = por %p47, %p48
    %p51 = scmp.ne.s32.totalorder %s34, %s50
    %p52 = scmp.eq.s32.totalorder %s14, 0
    %p53 = por %p51, %p52
    %s54 = ssub.s32 %s15, %s27
    %s55 = ssub.s32 %s16, %s23
    %s56 = sor.u32 %s54, %s55
    %p57 = scmp.eq.s32.totalorder %s56, 0
    %s59 = sadd.s32 %s58, 1
    %s60 = scalar_select %p57, %s58, %s59
    %p63 = pneg %p57
    %p64 = scmp.eq.s32.totalorder %s8, 1
    %p65 = por %p63, %p64
    %p66 = scmp.ne.s32.totalorder %s58, %s61
    %p67 = scmp.eq.s32.totalorder %s8, 0
    %p68 = por %p66, %p67
    %p69 = scmp.ne.s32.totalorder %s58, %s61
    %p70 = scmp.eq.s32.totalorder %s13, 1
    %p71 = por %p69, %p70
    %p72 = scmp.ne.s32.totalorder %s61, %s62
    %p73 = scmp.eq.s32.totalorder %s13, 0
    %p74 = por %p72, %p73
    %p75 = scmp.ne.s32.totalorder %s61, %s62
    %p76 = scmp.eq.s32.totalorder %s14, 1
    %p77 = por %p75, %p76
    %p79 = scmp.ne.s32.totalorder %s62, %s78
    %p80 = scmp.eq.s32.totalorder %s14, 0
    %p81 = por %p79, %p80
    %s82 = ssub.s32 %s15, %s27
    %p83 = scmp.eq.s32.totalorder %s82, 0
    %s85 = sadd.s32 %s84, 1
    %s86 = scalar_select %p83, %s84, %s85
    %p89 = pneg %p83
    %p90 = scmp.eq.s32.totalorder %s8, 1
    %p91 = por %p89, %p90
    %p92 = scmp.ne.s32.totalorder %s84, %s87
    %p93 = scmp.eq.s32.totalorder %s8, 0
    %p94 = por %p92, %p93
    %p95 = scmp.ne.s32.totalorder %s84, %s87
    %p96 = scmp.eq.s32.totalorder %s13, 1
    %p97 = por %p95, %p96
    %p98 = scmp.ne.s32.totalorder %s87, %s88
    %p99 = scmp.eq.s32.totalorder %s13, 0
    %p100 = por %p98, %p99
    %p101 = scmp.ne.s32.totalorder %s87, %s88
    %p102 = scmp.eq.s32.totalorder %s14, 1
    %p103 = por %p101, %p102
    %p105 = scmp.ne.s32.totalorder %s88, %s104
    %p106 = scmp.eq.s32.totalorder %s14, 0
    %p107 = por %p105, %p106
    %p108 = scmp.le.s32.totalorder 1, %s8
    %p109 = scmp.lt.s32.totalorder %s8, 3
    %p110 = pnand %p108, %p109
    %p111 = pneg %p110
    // Predicated region
    $region9: #{tpu_custom_call.1} parent=5 // pred_check
      _
    $region10: #{tpu_custom_call.1} parent=5 // pred_check_branch
      %113 = sbr.rel (%p110) target = $region12
    $region11: #{tpu_custom_call.1} parent=5 // pred_region
      %s114 = ssub.s32 %s8, 1
    $region12: #{tpu_custom_call.1} parent=5 // pred_fallthru
      _
    %p115 = scmp.lt.s32.totalorder %s8, 2
    // Predicated region
    $region13: #{tpu_custom_call.1} parent=5 // pred_check
      %p116 = pneg %p115
    $region14: #{tpu_custom_call.1} parent=5 // pred_check_branch
      %118 = sbr.rel (%p116) target = $region16
    $region15: #{tpu_custom_call.1} parent=5 // pred_region
      // Predicated region
      $region17: #{tpu_custom_call.1} parent=15 // pred_check
        %p119 = pneg %p40
      $region18: #{tpu_custom_call.1} parent=15 // pred_check_branch
        %121 = sbr.rel (%p119) target = $region20
      $region19: #{tpu_custom_call.1} parent=15 // pred_region
        %p122 = scmp.lt.s32.totalorder %s15, 1
        %s123 = scalar_select %p122, %s15, 1
        %s124 = smul.addr %s123, 8
        %s125 = scalar_lea.vmem %s0, %s124
      $region20: #{tpu_custom_call.1} parent=15 // pred_fallthru
        _
      // Predicated region
      $region21: #{tpu_custom_call.1} parent=15 // pred_check
        %p126 = pneg %p68
      $region22: #{tpu_custom_call.1} parent=15 // pred_check_branch
        %128 = sbr.rel (%p126) target = $region24
      $region23: #{tpu_custom_call.1} parent=15 // pred_region
        %p129 = scmp.lt.s32.totalorder %s15, 1
        %s130 = scalar_select %p129, %s15, 1
        %p131 = scmp.lt.s32.totalorder %s16, 0
        %s132 = scalar_select %p131, %s16, 0
        %s133 = sadd.s32 %s132, %s130
        %s134 = smul.addr %s133, 8
        %s135 = scalar_lea.vmem %s1, %s134
      $region24: #{tpu_custom_call.1} parent=15 // pred_fallthru
        _
    $region16: #{tpu_custom_call.1} parent=5 // pred_fallthru
      _
    %p136 = scmp.le.s32.totalorder 1, %s8
    %p137 = scmp.lt.s32.totalorder %s8, 3
    %p138 = pnand %p136, %p137
    %p139 = pneg %p138
    // Predicated region
    $region25: #{tpu_custom_call.1} parent=5 // pred_check
      _
    $region26: #{tpu_custom_call.1} parent=5 // pred_check_branch
      %141 = sbr.rel (%p138) target = $region28
    $region27: #{tpu_custom_call.1} parent=5 // pred_region
      %s142 = ssub.s32 %s8, 1
      %p143 = scmp.lt.s32.totalorder %s17, 1
      %s144 = scalar_select %p143, %s17, 1
      %s145 = smul.addr %s144, 8
      %s146 = scalar_lea.vmem %s0, %s145
      %p147 = pneg %p46
      %p148 = pneg %p43
      %p149 = scmp.lt.s32.totalorder %s17, 1
      %s150 = scalar_select %p149, %s17, 1
      %p151 = scmp.lt.s32.totalorder %s18, 0
      %s152 = scalar_select %p151, %s18, 0
      %s153 = sadd.s32 %s152, %s150
      %s154 = smul.addr %s153, 8
      %s155 = scalar_lea.vmem %s1, %s154
      %p156 = pneg %p74
      %p157 = pneg %p71
      %p158 = pneg %p100
      %p159 = pneg %p97
      %p160 = scmp.lt.s32.totalorder %s17, 1
      %s161 = scalar_select %p160, %s17, 1
      %s162 = smul.addr %s161, 8
      %s163 = scalar_lea.vmem %s2, %s162
      %p164 = scmp.lt.s32.totalorder %s17, 1
      %s165 = scalar_select %p164, %s17, 1
      %s166 = smul.addr %s165, 8
      %s167 = scalar_lea.vmem %s0, %s166
      %p168 = scmp.lt.s32.totalorder %s17, 1
      %s169 = scalar_select %p168, %s17, 1
      %p170 = scmp.lt.s32.totalorder %s18, 0
      %s171 = scalar_select %p170, %s18, 0
      %s172 = sadd.s32 %s171, %s169
      %s173 = smul.addr %s172, 8
      %s174 = scalar_lea.vmem %s1, %s173
      %p175 = scmp.lt.s32.totalorder %s17, 1
      %s176 = scalar_select %p175, %s17, 1
      %s177 = smul.addr %s176, 8
      %s178 = scalar_lea.vmem %s2, %s177
      %p179 = scmp.eq.s32.totalorder %s18, 0
      // Predicated region
      $region29: #{tpu_custom_call.1} parent=27 // pred_check
        %p180 = pneg %p179
      $region30: #{tpu_custom_call.1} parent=27 // pred_check_branch
        %182 = sbr.rel (%p180) target = $region32
      $region31: #{tpu_custom_call.1} parent=27 // pred_region
        %vm183 = vcmask 7168
        %184 = vst.msk [vmem:[#allocation2] sm:$0xff] %vm183, -inf
        %185 = vst.msk [vmem:[#allocation3] sm:$0xff] %vm183, 0.0
        %186 = vst.msk [vmem:[#allocation4] sm:$0xff] %vm183, 0.0
      $region32: #{tpu_custom_call.1} parent=27 // pred_fallthru
        _
      %v187 = vld [vmem:[%s174] sm:$0xff]
      %v188 = vld [vmem:[%s167] sm:$0xff]
      %v189 = vlaneseq
      %v190 = vand.u32 %v189, 127
      %v191 = vld [vmem:[#allocation2] sm:$0xff]
      %vm192 = vcmask 261120
      %v193 = vsel %vm192, %v187, -inf
      %194 = vmax.xlane.f32.xlu0 %v193
      %v195 = vpop.xlane.xlu0 %194
      %v196 = vmax.f32 %v191, %v195
      %v197 = vsub.f32 %v191, %v196
      %v198 = vmul.f32 %v197, 1.442695
      %v199 = vpow.pop %v198
      %v200 = vld [vmem:[#allocation3] sm:$0xff]
      %v201 = vmul.f32 %v199, %v200
      %203 = vset.pattern.permute.xlu0 0
      %204 = vperm.xlu0 %203, %v196
      %v205 = vpop.permute.xlu0 %204
      %v207 = vsub.f32 %v187, %v205
      %v208 = vmul.f32 %v207, 1.442695
      %v209 = vpow.pop %v208
      %v210 = vsel %vm192, %v209, 0.0
      %211 = vadd.xlane.f32.xlu0 %v210
      %v212 = vpop.xlane.xlu0 %211
      %v213 = vadd.f32 %v201, %v212
      %vm214 = vcmask 7168
      %215 = vst.msk [vmem:[#allocation3] sm:$0xff] %vm214, %v213
      %216 = vst.msk [vmem:[#allocation2] sm:$0xff] %vm214, %v196
      %s217 = smul.u32 %s18, 32
      %v218 = vstv %s217
      %v219 = vsub.s32 %v188, %v218
      %v220 = vld [vmem:[#allocation4] sm:$0xff]
      %221 = vset.pattern.permute.xlu0 0
      %222 = vperm.xlu0 %221, %v219
      %v223 = vpop.permute.xlu0 %222
      %vm224 = vcmp.eq.s32.totalorder %v190, %v223
      %v225 = vsel %vm224, %v187, 0.0
      %v226 = vsel %vm192, %v225, 0.0
      %227 = vadd.xlane.f32.xlu0 %v226
      %v228 = vpop.xlane.xlu0 %227
      %v229 = vadd.f32 %v220, %v228
      %230 = vst.msk [vmem:[#allocation4] sm:$0xff] %vm214, %v229
      // Predicated region
      $region33: #{tpu_custom_call.1} parent=27 // pred_check
        %p231 = pneg %p179
      $region34: #{tpu_custom_call.1} parent=27 // pred_check_branch
        %233 = sbr.rel (%p231) target = $region36
      $region35: #{tpu_custom_call.1} parent=27 // pred_region
        %v234 = vld [vmem:[#allocation2] sm:$0xff]
        %v235 = vld [vmem:[#allocation3] sm:$0xff]
        %v236 = vlog2.pop %v235
        %v237 = vmul.f32 %v236, 0.6931472
        %v238 = vadd.f32 %v234, %v237
        %v239 = vld [vmem:[#allocation4] sm:$0xff]
        %v240 = vsub.f32 %v238, %v239
        %s241 = smul.u32 %s17, 8
        %v242 = vlaneseq
        %v243 = vshrl.u32 %v242, 7
        %v244 = vstv %s241
        %v245 = vadd.s32 %v244, %v243
        %vm246 = vcmp.ne.s32.totalorder %v188, 0
        %vm247 = vcmp.lt.s32.totalorder %v245, 16
        %vm248 = vmand %vm246, %vm247
        %v249 = vsel %vm248, %v240, 0.0
        %250 = vst.msk [vmem:[%s178] sm:$0xff] %vm214, %v249
      $region36: #{tpu_custom_call.1} parent=27 // pred_fallthru
        _
      %p251 = scmp.lt.s32.totalorder %s17, 1
      %s252 = scalar_select %p251, %s17, 1
      %s253 = smul.addr %s252, 8
      %s254 = scalar_lea.vmem %s2, %s253
      // Predicated region
      $region37: #{tpu_custom_call.1} parent=27 // pred_check
        %p255 = pneg %p97
      $region38: #{tpu_custom_call.1} parent=27 // pred_check_branch
        %257 = sbr.rel (%p255) target = $region40
      $region39: #{tpu_custom_call.1} parent=27 // pred_region
        _
      $region40: #{tpu_custom_call.1} parent=27 // pred_fallthru
        _
    $region28: #{tpu_custom_call.1} parent=5 // pred_fallthru
      _
    %p258 = scmp.le.s32.totalorder 2, %s8
    // Predicated region
    $region41: #{tpu_custom_call.1} parent=5 // pred_check
      %p259 = pneg %p258
    $region42: #{tpu_custom_call.1} parent=5 // pred_check_branch
      %261 = sbr.rel (%p259) target = $region44
    $region43: #{tpu_custom_call.1} parent=5 // pred_region
      %s262 = ssub.s32 %s8, 2
      // Predicated region
      $region45: #{tpu_custom_call.1} parent=43 // pred_check
        %p263 = pneg %p103
      $region46: #{tpu_custom_call.1} parent=43 // pred_check_branch
        %265 = sbr.rel (%p263) target = $region48
      $region47: #{tpu_custom_call.1} parent=43 // pred_region
        %p266 = scmp.lt.s32.totalorder %s19, 1
        %s267 = scalar_select %p266, %s19, 1
        %s268 = smul.addr %s267, 8
        %s269 = scalar_lea.vmem %s2, %s268
      $region48: #{tpu_custom_call.1} parent=43 // pred_fallthru
        _
    $region44: #{tpu_custom_call.1} parent=5 // pred_fallthru
      _
  $region6: #{tpu_custom_call.1} parent=0 // loop_footer
    %s12 = sadd.s32 1, %s8
  $region7: #{tpu_custom_call.1} parent=0 // loop_footer_branch
    %7 = sbr.rel target = $region3
  $region8: #{tpu_custom_call.1} parent=0 // loop_exit
    _

</llo_original>
